<compile_context>
chip_gen: v5e
topology: v5e:2x2
jax: 0.10.0
libtpu: 0.0.40
codegen_flags: <defaults>
</compile_context>

<pallas_src>
import math

import jax
import jax.numpy as jnp
import numpy as np
from jax import lax
from jax.experimental import pallas as pl
from jax.experimental.pallas import tpu as pltpu


def _round_up(x, m):
    return ((x + m - 1) // m) * m


# ---------------------------------------------------------------------------
# Pallas kernel: one (tm, K) x (K, tn) MXU matmul tile + fused f32 bias
# ---------------------------------------------------------------------------

def _patch_embed_kernel(x_ref, w_ref, b_ref, o_ref):
    # x_ref (tm, K), w_ref (K, tn), b_ref (1, tn) f32 -> o_ref (tm, tn)
    acc = jnp.dot(x_ref[...], w_ref[...], preferred_element_type=jnp.float32)
    o_ref[...] = (acc + b_ref[...]).astype(o_ref.dtype)


# ---------------------------------------------------------------------------
# Wrapper: patchify (layout-only) + pallas_call
# ---------------------------------------------------------------------------

def patch_embed_forward(x, weight, bias, patch_size, input_type, *,
                        compute_dtype=jnp.bfloat16, tm_pref=512):
    """PatchEmbed forward. compute_dtype controls the MXU input dtype (accumulation
    is always f32, bias is added in f32, output keeps x.dtype)."""
    P = patch_size
    E = weight.shape[0]
    out_dtype = x.dtype

    xc = x.astype(compute_dtype)
    if input_type == '2d':
        B, C, H, W = x.shape
        assert H % P == 0 and W % P == 0
        nh, nw = H // P, W // P
        N = nh * nw
        K = C * P * P
        # Patch flatten order (nh, nw, C, kh, kw) matches Conv2d weight layout.
        # TODO(synk): this patchify is still an HBM->HBM copy of the (M, K) activation
        # matrix (pallas_call is a fusion boundary); folding it into the kernel needs
        # an in-VMEM (C,P,W)->(nw,K) rearrange whose Mosaic lowering is risky for
        # arbitrary P/W, so it stays in the wrapper (done in compute_dtype, so the
        # materialized copy is bf16-sized by default).
        patches = (xc.reshape(B, C, nh, P, nw, P)
                     .transpose(0, 2, 4, 1, 3, 5)
                     .reshape(B * N, K))
    elif input_type == '1d':
        B, C, T = x.shape
        assert T % P == 0
        N = T // P
        K = C * P
        patches = (xc.reshape(B, C, N, P)
                     .transpose(0, 2, 1, 3)
                     .reshape(B * N, K))
    else:
        raise NotImplementedError(input_type)

    M = B * N

    # ---- padding / tiling (lane-dense outputs, sublane-aligned rows) -------
    sub = 16                                   # bf16 sublane packing (also fine for f32)
    E_pad = _round_up(E, 128)                  # unmasked lane-dense output stores
    M_pad0 = _round_up(M, sub)
    tm = min(tm_pref, M_pad0)                  # big tiles -> per-step overhead amortized
    M_pad = _round_up(M_pad0, tm)              # robust for any M (padded rows sliced off)
    if M_pad != M:
        patches = jnp.pad(patches, ((0, M_pad - M), (0, 0)))

    w2 = weight.reshape(E, K).T.astype(compute_dtype)      # (K, E), contraction-major
    b2 = bias.reshape(1, E).astype(jnp.float32)            # bias stays f32
    if E_pad != E:
        w2 = jnp.pad(w2, ((0, 0), (0, E_pad - E)))
        b2 = jnp.pad(b2, ((0, 0), (0, E_pad - E)))

    in_dsize = jnp.dtype(compute_dtype).itemsize
    out_dsize = jnp.dtype(out_dtype).itemsize
    w_bytes = K * E_pad * in_dsize

    cost = pl.CostEstimate(
        flops=2 * M_pad * K * E_pad,
        bytes_accessed=(M_pad * K + K * E_pad) * in_dsize
                       + M_pad * E_pad * out_dsize + E_pad * 4,
        transcendentals=0)

    if w_bytes <= 24 * 1024 * 1024:
        # Weight-resident path: 1-D grid over M. Weight/bias block indices are
        # constant, so they are DMA'd once and reused by every M tile.
        grid = (M_pad // tm,)
        in_specs = [
            pl.BlockSpec((tm, K), lambda i: (i, 0)),        # activation tile
            pl.BlockSpec((K, E_pad), lambda i: (0, 0)),     # resident weight
            pl.BlockSpec((1, E_pad), lambda i: (0, 0)),     # resident bias
        ]
        out_specs = pl.BlockSpec((tm, E_pad), lambda i: (i, 0))
        dims = ("parallel",)
        vmem_need = (2 * tm * K * in_dsize + 2 * K * E_pad * in_dsize
                     + 2 * E_pad * 4 + 2 * tm * E_pad * out_dsize)
    else:
        # Fallback for very large K*E: tile E in lane-dense column blocks.
        tn = 512
        while E_pad % tn:
            tn //= 2                                        # 128 always divides E_pad
        grid = (M_pad // tm, E_pad // tn)
        in_specs = [
            pl.BlockSpec((tm, K), lambda i, j: (i, 0)),
            pl.BlockSpec((K, tn), lambda i, j: (0, j)),
            pl.BlockSpec((1, tn), lambda i, j: (0, j)),
        ]
        out_specs = pl.BlockSpec((tm, tn), lambda i, j: (i, j))
        dims = ("parallel", "parallel")
        vmem_need = (2 * tm * K * in_dsize + 2 * K * tn * in_dsize
                     + 2 * tn * 4 + 2 * tm * tn * out_dsize)

    # Tile-derived VMEM budget + headroom; never claim all of v7x's 64 MiB/TC.
    vmem_limit = int(min(max(vmem_need * 1.25 + (4 << 20), 16 << 20), 48 << 20))

    out = pl.pallas_call(
        _patch_embed_kernel,
        out_shape=jax.ShapeDtypeStruct((M_pad, E_pad), out_dtype),
        grid=grid,
        in_specs=in_specs,
        out_specs=out_specs,
        compiler_params=pltpu.CompilerParams(
            dimension_semantics=dims,
            vmem_limit_bytes=vmem_limit,
        ),
        cost_estimate=cost,
    )(patches, w2, b2)

    return out[:M, :E].reshape(B, N, E)


# ---------------------------------------------------------------------------
# PatchEmbed module equivalent (deterministic in-script parameters)
# ---------------------------------------------------------------------------

class PatchEmbed:
    """JAX/Pallas equivalent of the PyTorch PatchEmbed module."""

    def __init__(self, key, patch_size, in_chans=3, embed_dim=768, input_type='2d',
                 compute_dtype=jnp.bfloat16):
        self.patch_size = patch_size
        self.input_type = input_type
        self.compute_dtype = compute_dtype
        kw, kb = jax.random.split(key)
        if input_type == '2d':
            fan_in = in_chans * patch_size * patch_size
            wshape = (embed_dim, in_chans, patch_size, patch_size)
        elif input_type == '1d':
            fan_in = in_chans * patch_size
            wshape = (embed_dim, in_chans, patch_size)
        else:
            raise NotImplementedError(input_type)
        bound = 1.0 / math.sqrt(fan_in)   # nn.Conv default uniform init range
        self.weight = jax.random.uniform(kw, wshape, jnp.float32, -bound, bound)
        self.bias = jax.random.uniform(kb, (embed_dim,), jnp.float32, -bound, bound)

    def __call__(self, x):
        if self.input_type == '2d':
            B, C, H, W = x.shape
            assert H % self.patch_size == 0 and W % self.patch_size == 0
        else:
            B, C, H = x.shape
            assert H % self.patch_size == 0
        return patch_embed_forward(x, self.weight, self.bias,
                                   self.patch_size, self.input_type,
                                   compute_dtype=self.compute_dtype)


# ---------------------------------------------------------------------------
# Main: small deterministic tests (2d and 1d) vs pure-JAX conv reference
# ---------------------------------------------------------------------------

if __name__ == "__main__":
    key = jax.random.PRNGKey(0)
    k2d, k1d, kx2d, kx1d = jax.random.split(key, 4)

    # ---- 2d: x (B, C, H, W) = (2, 4, 16, 16), patch 4, embed 32 ----
    B, C, H, W, P, E = 2, 4, 16, 16, 4, 32
    pe2d = PatchEmbed(k2d, patch_size=P, in_chans=C, embed_dim=E, input_type='2d')
    x2d = jax.random.normal(kx2d, (B, C, H, W), jnp.float32)

    ref2 = lax.conv_general_dilated(
        x2d, pe2d.weight, window_strides=(P, P), padding='VALID',
        dimension_numbers=('NCHW', 'OIHW', 'NCHW'),
        precision=lax.Precision.HIGHEST)
    ref2 = (ref2 + pe2d.bias[None, :, None, None]).reshape(B, E, -1).transpose(0, 2, 1)

    # f32 compute path (exercises the non-bf16 branch)
    y2d_f32 = jax.block_until_ready(
        patch_embed_forward(x2d, pe2d.weight, pe2d.bias, P, '2d',
                            compute_dtype=jnp.float32))
    np.testing.assert_allclose(np.asarray(y2d_f32), np.asarray(ref2),
                               rtol=2e-2, atol=2e-2)

    # default bf16 MXU path (f32 accumulation)
    y2d = jax.block_until_ready(pe2d(x2d))
    np.testing.assert_allclose(np.asarray(y2d), np.asarray(ref2),
                               rtol=2e-2, atol=2e-2)

    # ---- 1d: x (B, C, T) = (2, 4, 16), patch 4, embed 32 ----
    T = 16
    pe1d = PatchEmbed(k1d, patch_size=P, in_chans=C, embed_dim=E, input_type='1d')
    x1d = jax.random.normal(kx1d, (B, C, T), jnp.float32)

    ref1 = lax.conv_general_dilated(
        x1d, pe1d.weight, window_strides=(P,), padding='VALID',
        dimension_numbers=('NCH', 'OIH', 'NCH'),
        precision=lax.Precision.HIGHEST)
    ref1 = (ref1 + pe1d.bias[None, :, None]).reshape(B, E, -1).transpose(0, 2, 1)

    y1d = jax.block_until_ready(pe1d(x1d))
    np.testing.assert_allclose(np.asarray(y1d), np.asarray(ref1),
                               rtol=2e-2, atol=2e-2)

    print("KERNEL_OK")
</pallas_src>

<mosaic_0001>
module attributes {stable_mosaic.version = 11 : i64} {
  func.func @_patch_embed_kernel(%arg0: i32, %arg1: memref<32x64xf32, #tpu.memory_space<vmem>>, %arg2: memref<64x128xf32, #tpu.memory_space<vmem>>, %arg3: memref<1x128xf32, #tpu.memory_space<vmem>>, %arg4: memref<32x128xf32, #tpu.memory_space<vmem>>) attributes {dimension_semantics = [#tpu.dimension_semantics<parallel>], iteration_bounds = array<i64: 1>, scalar_prefetch = 0 : i64, scratch_operands = 0 : i64, tpu.core_type = #tpu.core_type<tc>, window_params = [{transform_indices = @transform_0, window_bounds = array<i64: 32, 64>}, {pipeline_mode = #tpu.pipeline_mode<synchronous>, transform_indices = @transform_1, window_bounds = array<i64: 64, 128>}, {pipeline_mode = #tpu.pipeline_mode<synchronous>, transform_indices = @transform_2, window_bounds = array<i64: 1, 128>}, {transform_indices = @transform_3, window_bounds = array<i64: 32, 128>}]} {
    %c0 = arith.constant 0 : index
    %c0_0 = arith.constant 0 : index
    %0 = vector.load %arg1[%c0, %c0_0] : memref<32x64xf32, #tpu.memory_space<vmem>>, vector<32x64xf32>
    %c0_1 = arith.constant 0 : index
    %c0_2 = arith.constant 0 : index
    %1 = vector.load %arg2[%c0_1, %c0_2] : memref<64x128xf32, #tpu.memory_space<vmem>>, vector<64x128xf32>
    %cst = arith.constant dense<0.000000e+00> : vector<32x128xf32>
    %2 = tpu.matmul %0, %1, %cst {dimension_numbers = #tpu.dot_dimension_numbers<[1], [0], [0], [1], [0, 0, 1, 1], [], []>} : vector<32x64xf32>, vector<64x128xf32>, vector<32x128xf32> -> vector<32x128xf32>
    %c0_3 = arith.constant 0 : index
    %c0_4 = arith.constant 0 : index
    %3 = vector.load %arg3[%c0_3, %c0_4] : memref<1x128xf32, #tpu.memory_space<vmem>>, vector<1x128xf32>
    %4 = vector.broadcast %3 : vector<1x128xf32> to vector<32x128xf32>
    %5 = arith.addf %2, %4 : vector<32x128xf32>
    %c0_5 = arith.constant 0 : index
    %c0_6 = arith.constant 0 : index
    %6 = vector.load %arg4[%c0_5, %c0_6] : memref<32x128xf32, #tpu.memory_space<vmem>>, vector<32x128xf32>
    tpu.vector_store %arg4[%c0_5, %c0_6], %5 {strides = array<i32>} : memref<32x128xf32, #tpu.memory_space<vmem>>, vector<32x128xf32>,
    return
  }
  func.func @transform_0(%arg0: i32) -> (i32, i32) {
    %c0_i32 = arith.constant 0 : i32
    %c0_i32_0 = arith.constant 0 : i32
    return %arg0, %c0_i32 : i32, i32
  }
  func.func @transform_1(%arg0: i32) -> (i32, i32) {
    %c0_i32 = arith.constant 0 : i32
    %c0_i32_0 = arith.constant 0 : i32
    %c0_i32_1 = arith.constant 0 : i32
    return %c0_i32, %c0_i32_0 : i32, i32
  }
  func.func @transform_2(%arg0: i32) -> (i32, i32) {
    %c0_i32 = arith.constant 0 : i32
    %c0_i32_0 = arith.constant 0 : i32
    %c0_i32_1 = arith.constant 0 : i32
    return %c0_i32, %c0_i32_0 : i32, i32
  }
  func.func @transform_3(%arg0: i32) -> (i32, i32) {
    %c0_i32 = arith.constant 0 : i32
    %c0_i32_0 = arith.constant 0 : i32
    return %arg0, %c0_i32 : i32, i32
  }
}

</mosaic_0001>

<llo_original>
// kernel: tpu_custom_call.1
$region0: #{tpu_custom_call.1}
  #allocation0 [shape = 'u32[]', space=smem, size = 0x4, offset = 0x4, fixed_abs, tag = 'smem constant byte address 0x4 - core index']
  #allocation1 [shape = 'u32[72,128]{1,0:T(1,128)}', space=vmem, size = 0x9000, scoped, tag = 'internal scratch']
  %s0 = inlined_call_operand.hbm [shape: f32[32,64], index: 0, kind: input, shape index: {}]
  %s1 = inlined_call_operand.hbm [shape: f32[64,128], index: 1, kind: input, shape index: {}]
  %s2 = inlined_call_operand.vmem [shape: f32[1,128], index: 2, kind: input, shape index: {}]
  %s3 = inlined_call_operand.hbm [shape: f32[32,128], index: 3, kind: output, shape index: {}]
  %s4 = sld [smem:[#allocation0]]
  $region30: #{tpu_custom_call.1} parent=0
    _
  %s6 = ssub.s32 1, %s4
  %s7 = scalar_select 0, %s6, %s4
  $region1: #{tpu_custom_call.1} parent=0
    #allocation2 [shape = 'u8[16384]{0}', space=vmem, size = 0x4000, scoped, tag = 'input window, operand 0, single buffered']
    #allocation3 [shape = 's32[1]{0}', space=sflag, size = 0x4, scoped, tag = 'scoped memory for tpu_custom_call.1']
    #allocation4 [shape = 's32[1]{0}', space=sflag, size = 0x4, scoped, tag = 'scoped memory for tpu_custom_call.1']
    #allocation5 [shape = 'u8[32768]{0}', space=vmem, size = 0x8000, scoped, tag = 'input window, operand 1, single buffered']
    #allocation6 [shape = 's32[1]{0}', space=sflag, size = 0x4, scoped, tag = 'scoped memory for tpu_custom_call.1']
    #allocation7 [shape = 'u8[16384]{0}', space=vmem, size = 0x4000, scoped, tag = 'output window, operand 0, single buffered']
    %8 = vsyncpa [#allocation3], 0
    %9 = vsyncpa [#allocation6], 0
    %10 = vsyncpa [#allocation4], 0
    // Predicated region
    $region2: #{tpu_custom_call.1} parent=1 // pred_check
      _
    $region3: #{tpu_custom_call.1} parent=1 // pred_check_branch
      %12 = sbr.rel (0) target = $region5
    $region4: #{tpu_custom_call.1} parent=1 // pred_region
      %14 = vsyncadd [#allocation3], 0
      %s15 = sshll.u32 %s0, 4
      %s16 = int_to_ptr.hbm [resolvable:$true] %s15
      %s17 = sshll.u32 [#allocation2], 4
      %s18 = int_to_ptr.vmem [resolvable:$true] %s17
      %23 = dma.hbm_to_vmem [thread:$0]  %s16, 512, %s18, [#allocation3], 128, 128, 8
    $region5: #{tpu_custom_call.1} parent=1 // pred_fallthru
      _
    // Predicated region
    $region6: #{tpu_custom_call.1} parent=1 // pred_check
      _
    $region7: #{tpu_custom_call.1} parent=1 // pred_check_branch
      %25 = sbr.rel (0) target = $region9
    $region8: #{tpu_custom_call.1} parent=1 // pred_region
      %27 = vsyncadd [#allocation6], 0
      %s28 = sshll.u32 %s1, 4
      %s29 = int_to_ptr.hbm [resolvable:$true] %s28
      %s30 = sshll.u32 [#allocation5], 4
      %s31 = int_to_ptr.vmem [resolvable:$true] %s30
      %36 = dma.hbm_to_vmem [thread:$0]  %s29, 1024, %s31, [#allocation6], 128, 128, 8
    $region9: #{tpu_custom_call.1} parent=1 // pred_fallthru
      _
    // Predicated region
    $region10: #{tpu_custom_call.1} parent=1 // pred_check
      _
    $region11: #{tpu_custom_call.1} parent=1 // pred_check_branch
      %38 = sbr.rel (0) target = $region13
    $region12: #{tpu_custom_call.1} parent=1 // pred_region
      _
    $region13: #{tpu_custom_call.1} parent=1 // pred_fallthru
      _
    // Predicated region
    $region14: #{tpu_custom_call.1} parent=1 // pred_check
      _
    $region15: #{tpu_custom_call.1} parent=1 // pred_check_branch
      %40 = sbr.rel (0) target = $region17
    $region16: #{tpu_custom_call.1} parent=1 // pred_region
      %42 = dma.done [#allocation3], 512
    $region17: #{tpu_custom_call.1} parent=1 // pred_fallthru
      _
    // Predicated region
    $region18: #{tpu_custom_call.1} parent=1 // pred_check
      _
    $region19: #{tpu_custom_call.1} parent=1 // pred_check_branch
      %44 = sbr.rel (0) target = $region21
    $region20: #{tpu_custom_call.1} parent=1 // pred_region
      %46 = dma.done [#allocation6], 1024
    $region21: #{tpu_custom_call.1} parent=1 // pred_fallthru
      _
    %v47 = vld [vmem:[#allocation2] sm:$0xff]
    %v48 = vld [vmem:[#allocation2 + $0x8] sm:$0xff]
    %v49 = vld [vmem:[#allocation2 + $0x10] sm:$0xff]
    %v50 = vld [vmem:[#allocation2 + $0x18] sm:$0xff]
    %v51 = vld [vmem:[#allocation5] sm:$0xff]
    %v52 = vld [vmem:[#allocation5 + $0x8] sm:$0xff]
    %v53 = vld [vmem:[#allocation5 + $0x10] sm:$0xff]
    %v54 = vld [vmem:[#allocation5 + $0x18] sm:$0xff]
    %v55 = vld [vmem:[#allocation5 + $0x20] sm:$0xff]
    %v56 = vld [vmem:[#allocation5 + $0x28] sm:$0xff]
    %v57 = vld [vmem:[#allocation5 + $0x30] sm:$0xff]
    %v58 = vld [vmem:[#allocation5 + $0x38] sm:$0xff]
    %v59 = vld [vmem:[%s2] sm:$0x1]
    %v61 = vperm.slane %v59, 0
    %vm63 = vcmask 523264
    %v65 = vsel %vm63, %v47, 0
    %v68 = vsel %vm63, %v48, 0
    %v71 = vsel %vm63, %v49, 0
    %v74 = vsel %vm63, %v50, 0
    %76 = vmatpush.msra.mxu0 0.0
    %77 = vmatpush.msra.mxu0 0.0
    %78 = vmatpush.msra.mxu0 0.0
    %79 = vmatpush.msra.mxu0 0.0
    %80 = vmatpush.msra.mxu0 0.0
    %81 = vmatpush.msra.mxu0 0.0
    %82 = vmatpush.msra.mxu0 0.0
    %83 = vmatpush.msra.mxu0 0.0
    %84 = vmatpush.msra.mxu0 %v58
    %85 = vmatpush.msra.mxu0 %v57
    %86 = vmatpush.msra.mxu0 %v56
    %87 = vmatpush.msra.mxu0 %v55
    %88 = vmatpush.msra.mxu0 %v54
    %89 = vmatpush.msra.mxu0 %v53
    %90 = vmatpush.msra.mxu0 %v52
    %91 = vmatpush.msra.mxu0 %v51
    %92 = vmatmul.f32.gmra.mxu0 %v65
    %v93 = vpop.f32.mrf.mxu0
    %v94 = vadd.f32 %v61, %v93
    %95 = vmatmul.f32.gmra.mxu0 %v68
    %v96 = vpop.f32.mrf.mxu0
    %v97 = vadd.f32 %v61, %v96
    %98 = vmatmul.f32.gmra.mxu0 %v71
    %v99 = vpop.f32.mrf.mxu0
    %v100 = vadd.f32 %v61, %v99
    %101 = vmatmul.f32.gmra.mxu0 %v74
    %v102 = vpop.f32.mrf.mxu0
    %v103 = vadd.f32 %v61, %v102
    %104 = vdwg.mxu0
    %105 = vst [vmem:[#allocation7] sm:$0xff] %v94
    %106 = vst [vmem:[#allocation7 + $0x8] sm:$0xff] %v97
    %107 = vst [vmem:[#allocation7 + $0x10] sm:$0xff] %v100
    %108 = vst [vmem:[#allocation7 + $0x18] sm:$0xff] %v103
    // Predicated region
    $region22: #{tpu_custom_call.1} parent=1 // pred_check
      _
    $region23: #{tpu_custom_call.1} parent=1 // pred_check_branch
      %110 = sbr.rel (0) target = $region25
    $region24: #{tpu_custom_call.1} parent=1 // pred_region
      %112 = vsyncadd [#allocation4], 0
      %s113 = sshll.u32 [#allocation7], 4
      %s114 = int_to_ptr.vmem [resolvable:$true] %s113
      %s115 = sshll.u32 %s3, 4
      %s116 = int_to_ptr.hbm [resolvable:$true] %s115
      %121 = dma.vmem_to_hbm [thread:$0]  %s114, 512, %s116, [#allocation4], 128, 128, 8
    $region25: #{tpu_custom_call.1} parent=1 // pred_fallthru
      _
    // Predicated region
    $region26: #{tpu_custom_call.1} parent=1 // pred_check
      _
    $region27: #{tpu_custom_call.1} parent=1 // pred_check_branch
      %123 = sbr.rel (0) target = $region29
    $region28: #{tpu_custom_call.1} parent=1 // pred_region
      %125 = dma.done [#allocation4], 512
    $region29: #{tpu_custom_call.1} parent=1 // pred_fallthru
      _
    %126 = vsyncpa [#allocation3], 1
    %127 = vsyncpa [#allocation6], 1
    %128 = vsyncpa [#allocation4], 1

</llo_original>
